<compile_context>
chip_gen: v6e
topology: v6e:2x2x1
jax: 0.10.0
libtpu: 0.0.40
codegen_flags: <defaults>
</compile_context>

<pallas_src>
import jax
import jax.numpy as jnp
from jax.experimental import pallas as pl
from jax.experimental.pallas import tpu as pltpu


_LANE = 128


def _round_up(x, m):
    return (x + m - 1) // m * m


def _pad2d(x, rows, cols):
    r, c = x.shape
    return jnp.pad(x, ((0, rows - r), (0, cols - c)))


# ---------------------------------------------------------------------------
# Fused Pallas kernel
# ---------------------------------------------------------------------------

def _make_gcn_kernel(n_gconv):
    """Fused kernel: n_gconv GraphConv layers + Linear head, all in VMEM."""

    def kernel(*refs):
        a_ref = refs[0]                      # bf16 [N, N], resident for all layers
        x_ref = refs[1]                      # f32  [N, Fin]
        wb = refs[2:2 + 2 * n_gconv]         # (w0, b0, w1, b1, ...) lane-padded
        wo_ref = refs[2 + 2 * n_gconv]       # [Hp, Cp]
        bo_ref = refs[3 + 2 * n_gconv]       # [1, Cp]
        h_ref = refs[4 + 2 * n_gconv]        # out: [N, Hp]
        logits_ref = refs[5 + 2 * n_gconv]   # out: [N, Cp]

        a = a_ref[...]
        h = x_ref[...]
        for l in range(n_gconv):
            w = wb[2 * l][...]
            b = wb[2 * l + 1][...]
            fin, fout = w.shape
            if fin < fout:
                # Aggregate first: (A @ h) @ W  -- fewer MACs on the N*N matmul.
                agg = jnp.dot(a, h.astype(jnp.bfloat16),
                              preferred_element_type=jnp.float32)
                z = jnp.dot(agg, w, preferred_element_type=jnp.float32)
            else:
                # Transform first: A @ (h @ W).
                hw = jnp.dot(h, w, preferred_element_type=jnp.float32)
                z = jnp.dot(a, hw.astype(jnp.bfloat16),
                            preferred_element_type=jnp.float32)
            h = jnp.maximum(z + b, 0.0)

        h_ref[...] = h
        logits_ref[...] = (jnp.dot(h, wo_ref[...],
                                   preferred_element_type=jnp.float32)
                           + bo_ref[...])

    return kernel


# ---------------------------------------------------------------------------
# Wrapper
# ---------------------------------------------------------------------------

def gcn_forward(a_hat, features, gconv_params, lin_w, lin_b):
    """Mirrors GCN.forward: returns (h, logits)."""
    N, in_feats = features.shape
    n_gconv = len(gconv_params)
    n_hidden = gconv_params[-1][0].shape[1]
    n_classes = lin_b.shape[0]
    hp = _round_up(n_hidden, _LANE)      # lane-dense hidden width
    cp = _round_up(n_classes, _LANE)     # lane-dense logits width

    # A_hat in bf16 (f32 accumulation kept on the MXU).
    a_bf16 = a_hat.astype(jnp.bfloat16)

    # Build lane-padded operand list + cost estimate.
    args = [a_bf16, features]
    flops = 0
    prev = in_feats
    for (w, b) in gconv_params:
        fout_p = _round_up(w.shape[1], _LANE)
        args.append(_pad2d(w, prev, fout_p))
        args.append(_pad2d(b.reshape(1, -1), 1, fout_p))
        if prev < fout_p:
            flops += 2 * N * N * prev + 2 * N * prev * fout_p
        else:
            flops += 2 * N * prev * fout_p + 2 * N * N * fout_p
        prev = fout_p
    args.append(_pad2d(lin_w, hp, cp))
    args.append(_pad2d(lin_b.reshape(1, -1), 1, cp))
    flops += 2 * N * hp * cp

    in_bytes = sum(int(a.size) * a.dtype.itemsize for a in args)
    out_bytes = (N * hp + N * cp) * 4

    # No grid: a single VMEM-resident block per operand (problem is tiny).
    in_specs = [pl.BlockSpec(a.shape, lambda *_: (0, 0)) for a in args]
    out_shape = (jax.ShapeDtypeStruct((N, hp), jnp.float32),
                 jax.ShapeDtypeStruct((N, cp), jnp.float32))
    out_specs = (pl.BlockSpec((N, hp), lambda *_: (0, 0)),
                 pl.BlockSpec((N, cp), lambda *_: (0, 0)))

    h_pad, logits_pad = pl.pallas_call(
        _make_gcn_kernel(n_gconv),
        out_shape=out_shape,
        in_specs=in_specs,
        out_specs=out_specs,
        cost_estimate=pl.CostEstimate(
            flops=flops, transcendentals=0,
            bytes_accessed=in_bytes + out_bytes),
        compiler_params=pltpu.CompilerParams(
            vmem_limit_bytes=32 * 1024 * 1024),
    )(*args)

    # Padded lanes are exactly zero; slice back to the module's widths.
    return h_pad[:, :n_hidden], logits_pad[:, :n_classes]


# ---------------------------------------------------------------------------
# Parameter / graph construction (deterministic, synthetic)
# ---------------------------------------------------------------------------

def build_normalized_adjacency(key, n_nodes, p_edge=0.05):
    """Symmetric random graph + self-loops, symmetric norm D^{-1/2} A D^{-1/2}."""
    a = jax.random.bernoulli(key, p_edge, (n_nodes, n_nodes)).astype(jnp.float32)
    a = jnp.maximum(a, a.T)                                   # undirected
    a = jnp.maximum(a, jnp.eye(n_nodes, dtype=jnp.float32))   # self-loops
    deg = jnp.clip(a.sum(axis=1), 1.0, None)
    d_inv_sqrt = 1.0 / jnp.sqrt(deg)
    return a * d_inv_sqrt[:, None] * d_inv_sqrt[None, :]


def glorot(key, fan_in, fan_out):
    lim = jnp.sqrt(6.0 / (fan_in + fan_out))
    return jax.random.uniform(key, (fan_in, fan_out), jnp.float32, -lim, lim)


def build_params(key, in_feats, n_hidden, n_classes, n_layers):
    dims = [in_feats] + [n_hidden] * n_layers     # n_layers GraphConv layers
    gconv = []
    for i in range(n_layers):
        key, kw = jax.random.split(key)
        w = glorot(kw, dims[i], dims[i + 1])
        b = jnp.zeros((dims[i + 1],), jnp.float32)
        gconv.append((w, b))
    key, kw, kb = jax.random.split(key, 3)
    lin_w = glorot(kw, n_hidden, n_classes)
    lin_b = jax.random.uniform(kb, (n_classes,), jnp.float32, -0.1, 0.1)
    return gconv, lin_w, lin_b


# ---------------------------------------------------------------------------
# Main
# ---------------------------------------------------------------------------

if __name__ == "__main__":
    N_NODES = 128
    IN_FEATS = 32
    N_HIDDEN = 64
    N_CLASSES = 8
    N_LAYERS = 2   # -> GraphConv(32,64), GraphConv(64,64), Linear(64,8)

    root = jax.random.PRNGKey(0)
    k_graph, k_feat, k_params = jax.random.split(root, 3)

    a_hat = build_normalized_adjacency(k_graph, N_NODES)
    features = jax.random.normal(k_feat, (N_NODES, IN_FEATS), jnp.float32)
    gconv_params, lin_w, lin_b = build_params(
        k_params, IN_FEATS, N_HIDDEN, N_CLASSES, N_LAYERS)

    fwd = jax.jit(gcn_forward)
    h, logits = fwd(a_hat, features, gconv_params, lin_w, lin_b)
    jax.block_until_ready((h, logits))

    # Pure-JAX reference, mirroring the kernel's precision contract
    # (A_hat in bf16, bf16 MXU inputs for the aggregation, f32 accumulation,
    # reassociated layer order when Fin < Fout).
    a_bf16 = a_hat.astype(jnp.bfloat16)
    h_ref = features
    for (w, b) in gconv_params:
        if w.shape[0] < w.shape[1]:
            agg = jnp.dot(a_bf16, h_ref.astype(jnp.bfloat16),
                          preferred_element_type=jnp.float32)
            z = agg @ w
        else:
            hw = h_ref @ w
            z = jnp.dot(a_bf16, hw.astype(jnp.bfloat16),
                        preferred_element_type=jnp.float32)
        h_ref = jnp.maximum(z + b, 0.0)
    logits_ref = h_ref @ lin_w + lin_b

    assert h.shape == (N_NODES, N_HIDDEN)
    assert logits.shape == (N_NODES, N_CLASSES)
    # 5e-3 tolerance: bf16 rounding of intermediates can differ by an ULP
    # between the kernel and the XLA-level reference.
    assert jnp.allclose(h, h_ref, atol=5e-3, rtol=5e-3)
    assert jnp.allclose(logits, logits_ref, atol=5e-3, rtol=5e-3)

    print("KERNEL_OK")
</pallas_src>

<mosaic_0001>
module attributes {stable_mosaic.version = 11 : i64} {
  func.func @kernel(%arg0: memref<128x128xbf16, #tpu.memory_space<vmem>>, %arg1: memref<128x32xf32, #tpu.memory_space<vmem>>, %arg2: memref<32x128xf32, #tpu.memory_space<vmem>>, %arg3: memref<1x128xf32, #tpu.memory_space<vmem>>, %arg4: memref<128x128xf32, #tpu.memory_space<vmem>>, %arg5: memref<1x128xf32, #tpu.memory_space<vmem>>, %arg6: memref<128x128xf32, #tpu.memory_space<vmem>>, %arg7: memref<1x128xf32, #tpu.memory_space<vmem>>, %arg8: memref<128x128xf32, #tpu.memory_space<vmem>>, %arg9: memref<128x128xf32, #tpu.memory_space<vmem>>) attributes {dimension_semantics = [], scalar_prefetch = 0 : i64, scratch_operands = 0 : i64, tpu.core_type = #tpu.core_type<tc>} {
    %c0 = arith.constant 0 : index
    %c0_0 = arith.constant 0 : index
    %0 = vector.load %arg0[%c0, %c0_0] : memref<128x128xbf16, #tpu.memory_space<vmem>>, vector<128x128xbf16>
    %c0_1 = arith.constant 0 : index
    %c0_2 = arith.constant 0 : index
    %1 = vector.load %arg1[%c0_1, %c0_2] : memref<128x32xf32, #tpu.memory_space<vmem>>, vector<128x32xf32>
    %c0_3 = arith.constant 0 : index
    %c0_4 = arith.constant 0 : index
    %2 = vector.load %arg2[%c0_3, %c0_4] : memref<32x128xf32, #tpu.memory_space<vmem>>, vector<32x128xf32>
    %c0_5 = arith.constant 0 : index
    %c0_6 = arith.constant 0 : index
    %3 = vector.load %arg3[%c0_5, %c0_6] : memref<1x128xf32, #tpu.memory_space<vmem>>, vector<1x128xf32>
    %4 = arith.truncf %1 : vector<128x32xf32> to vector<128x32xbf16>
    %cst = arith.constant dense<0.000000e+00> : vector<128x32xf32>
    %5 = tpu.matmul %0, %4, %cst {dimension_numbers = #tpu.dot_dimension_numbers<[1], [0], [0], [1], [0, 0, 1, 1], [], []>} : vector<128x128xbf16>, vector<128x32xbf16>, vector<128x32xf32> -> vector<128x32xf32>
    %cst_7 = arith.constant dense<0.000000e+00> : vector<128x128xf32>
    %6 = tpu.matmul %5, %2, %cst_7 {dimension_numbers = #tpu.dot_dimension_numbers<[1], [0], [0], [1], [0, 0, 1, 1], [], []>} : vector<128x32xf32>, vector<32x128xf32>, vector<128x128xf32> -> vector<128x128xf32>
    %7 = vector.broadcast %3 : vector<1x128xf32> to vector<128x128xf32>
    %8 = arith.addf %6, %7 : vector<128x128xf32>
    %cst_8 = arith.constant 0.000000e+00 : f32
    %9 = vector.broadcast %cst_8 : f32 to vector<128x128xf32>
    %10 = arith.maximumf %8, %9 : vector<128x128xf32>
    %c0_9 = arith.constant 0 : index
    %c0_10 = arith.constant 0 : index
    %11 = vector.load %arg4[%c0_9, %c0_10] : memref<128x128xf32, #tpu.memory_space<vmem>>, vector<128x128xf32>
    %c0_11 = arith.constant 0 : index
    %c0_12 = arith.constant 0 : index
    %12 = vector.load %arg5[%c0_11, %c0_12] : memref<1x128xf32, #tpu.memory_space<vmem>>, vector<1x128xf32>
    %cst_13 = arith.constant dense<0.000000e+00> : vector<128x128xf32>
    %13 = tpu.matmul %10, %11, %cst_13 {dimension_numbers = #tpu.dot_dimension_numbers<[1], [0], [0], [1], [0, 0, 1, 1], [], []>} : vector<128x128xf32>, vector<128x128xf32>, vector<128x128xf32> -> vector<128x128xf32>
    %14 = arith.truncf %13 : vector<128x128xf32> to vector<128x128xbf16>
    %cst_14 = arith.constant dense<0.000000e+00> : vector<128x128xf32>
    %15 = tpu.matmul %0, %14, %cst_14 {dimension_numbers = #tpu.dot_dimension_numbers<[1], [0], [0], [1], [0, 0, 1, 1], [], []>} : vector<128x128xbf16>, vector<128x128xbf16>, vector<128x128xf32> -> vector<128x128xf32>
    %16 = vector.broadcast %12 : vector<1x128xf32> to vector<128x128xf32>
    %17 = arith.addf %15, %16 : vector<128x128xf32>
    %cst_15 = arith.constant 0.000000e+00 : f32
    %18 = vector.broadcast %cst_15 : f32 to vector<128x128xf32>
    %19 = arith.maximumf %17, %18 : vector<128x128xf32>
    %c0_16 = arith.constant 0 : index
    %c0_17 = arith.constant 0 : index
    %20 = vector.load %arg8[%c0_16, %c0_17] : memref<128x128xf32, #tpu.memory_space<vmem>>, vector<128x128xf32>
    tpu.vector_store %arg8[%c0_16, %c0_17], %19 {strides = array<i32>} : memref<128x128xf32, #tpu.memory_space<vmem>>, vector<128x128xf32>,
    %c0_18 = arith.constant 0 : index
    %c0_19 = arith.constant 0 : index
    %21 = vector.load %arg6[%c0_18, %c0_19] : memref<128x128xf32, #tpu.memory_space<vmem>>, vector<128x128xf32>
    %cst_20 = arith.constant dense<0.000000e+00> : vector<128x128xf32>
    %22 = tpu.matmul %19, %21, %cst_20 {dimension_numbers = #tpu.dot_dimension_numbers<[1], [0], [0], [1], [0, 0, 1, 1], [], []>} : vector<128x128xf32>, vector<128x128xf32>, vector<128x128xf32> -> vector<128x128xf32>
    %c0_21 = arith.constant 0 : index
    %c0_22 = arith.constant 0 : index
    %23 = vector.load %arg7[%c0_21, %c0_22] : memref<1x128xf32, #tpu.memory_space<vmem>>, vector<1x128xf32>
    %24 = vector.broadcast %23 : vector<1x128xf32> to vector<128x128xf32>
    %25 = arith.addf %22, %24 : vector<128x128xf32>
    %c0_23 = arith.constant 0 : index
    %c0_24 = arith.constant 0 : index
    %26 = vector.load %arg9[%c0_23, %c0_24] : memref<128x128xf32, #tpu.memory_space<vmem>>, vector<128x128xf32>
    tpu.vector_store %arg9[%c0_23, %c0_24], %25 {strides = array<i32>} : memref<128x128xf32, #tpu.memory_space<vmem>>, vector<128x128xf32>,
    return
  }
}

</mosaic_0001>

<llo_original>
// kernel: gcn_forward.1
$region0: #{gcn_forward.1}
  #allocation0 [shape = 'u32[]', space=smem, size = 0x4, offset = 0x4, fixed_abs, tag = 'smem constant byte address 0x4 - core index']
  #allocation1 [shape = 'u32[144,128]{1,0:T(1,128)}', space=vmem, size = 0x12000, scoped, tag = 'internal scratch']
  %s0 = inlined_call_operand.vmem [shape: bf16[128,128], index: 0, kind: input, shape index: {}]
  %s1 = inlined_call_operand.vmem [shape: f32[128,32], index: 1, kind: input, shape index: {}]
  %s2 = inlined_call_operand.vmem [shape: f32[32,128], index: 2, kind: input, shape index: {}]
  %s3 = inlined_call_operand.vmem [shape: f32[1,128], index: 3, kind: input, shape index: {}]
  %s4 = inlined_call_operand.vmem [shape: f32[128,128], index: 4, kind: input, shape index: {}]
  %s5 = inlined_call_operand.vmem [shape: f32[1,128], index: 5, kind: input, shape index: {}]
  %s6 = inlined_call_operand.vmem [shape: f32[128,128], index: 6, kind: input, shape index: {}]
  %s7 = inlined_call_operand.vmem [shape: f32[1,128], index: 7, kind: input, shape index: {}]
  %s8 = inlined_call_operand.vmem [shape: f32[128,128], index: 8, kind: output, shape index: {0}]
  %s9 = inlined_call_operand.vmem [shape: f32[128,128], index: 9, kind: output, shape index: {1}]
  %10 = xla_tuple %s8, %s9
  %s11 = sld [smem:[#allocation0]]
  $region50: #{gcn_forward.1} parent=0
    _
  %s13 = ssub.s32 1, %s11
  %s14 = scalar_select 0, %s13, %s11
  // Predicated region
  $region2: #{gcn_forward.1} parent=0 // pred_check
    _
  $region3: #{gcn_forward.1} parent=0 // pred_check_branch
    %16 = sbr.rel (0) target = $region5
  $region4: #{gcn_forward.1} parent=0 // pred_region
    _
  $region5: #{gcn_forward.1} parent=0 // pred_fallthru
    _
  // Predicated region
  $region6: #{gcn_forward.1} parent=0 // pred_check
    _
  $region7: #{gcn_forward.1} parent=0 // pred_check_branch
    %18 = sbr.rel (0) target = $region9
  $region8: #{gcn_forward.1} parent=0 // pred_region
    _
  $region9: #{gcn_forward.1} parent=0 // pred_fallthru
    _
  // Predicated region
  $region10: #{gcn_forward.1} parent=0 // pred_check
    _
  $region11: #{gcn_forward.1} parent=0 // pred_check_branch
    %20 = sbr.rel (0) target = $region13
  $region12: #{gcn_forward.1} parent=0 // pred_region
    _
  $region13: #{gcn_forward.1} parent=0 // pred_fallthru
    _
  // Predicated region
  $region14: #{gcn_forward.1} parent=0 // pred_check
    _
  $region15: #{gcn_forward.1} parent=0 // pred_check_branch
    %22 = sbr.rel (0) target = $region17
  $region16: #{gcn_forward.1} parent=0 // pred_region
    _
  $region17: #{gcn_forward.1} parent=0 // pred_fallthru
    _
  // Predicated region
  $region18: #{gcn_forward.1} parent=0 // pred_check
    _
  $region19: #{gcn_forward.1} parent=0 // pred_check_branch
    %24 = sbr.rel (0) target = $region21
  $region20: #{gcn_forward.1} parent=0 // pred_region
    _
  $region21: #{gcn_forward.1} parent=0 // pred_fallthru
    _
  // Predicated region
  $region22: #{gcn_forward.1} parent=0 // pred_check
    _
  $region23: #{gcn_forward.1} parent=0 // pred_check_branch
    %26 = sbr.rel (0) target = $region25
  $region24: #{gcn_forward.1} parent=0 // pred_region
    _
  $region25: #{gcn_forward.1} parent=0 // pred_fallthru
    _
  // Predicated region
  $region26: #{gcn_forward.1} parent=0 // pred_check
    _
  $region27: #{gcn_forward.1} parent=0 // pred_check_branch
    %28 = sbr.rel (0) target = $region29
  $region28: #{gcn_forward.1} parent=0 // pred_region
    _
  $region29: #{gcn_forward.1} parent=0 // pred_fallthru
    _
  // Predicated region
  $region30: #{gcn_forward.1} parent=0 // pred_check
    _
  $region31: #{gcn_forward.1} parent=0 // pred_check_branch
    %30 = sbr.rel (0) target = $region33
  $region32: #{gcn_forward.1} parent=0 // pred_region
    _
  $region33: #{gcn_forward.1} parent=0 // pred_fallthru
    _
  %v32 = vld [vmem:[%s0] sm:$0xf]
  %v33 = vld [vmem:[%s0 + $0x4] sm:$0xf]
  %v34 = vld [vmem:[%s0 + $0x8] sm:$0xf]
  %v35 = vld [vmem:[%s0 + $0xc] sm:$0xf]
  %v36 = vld [vmem:[%s0 + $0x10] sm:$0xf]
  %v37 = vld [vmem:[%s0 + $0x14] sm:$0xf]
  %v38 = vld [vmem:[%s0 + $0x18] sm:$0xf]
  %v39 = vld [vmem:[%s0 + $0x1c] sm:$0xf]
  %v40 = vld [vmem:[%s0 + $0x20] sm:$0xf]
  %v41 = vld [vmem:[%s0 + $0x24] sm:$0xf]
  %v42 = vld [vmem:[%s0 + $0x28] sm:$0xf]
  %v43 = vld [vmem:[%s0 + $0x2c] sm:$0xf]
  %v44 = vld [vmem:[%s0 + $0x30] sm:$0xf]
  %v45 = vld [vmem:[%s0 + $0x34] sm:$0xf]
  %v46 = vld [vmem:[%s0 + $0x38] sm:$0xf]
  %v47 = vld [vmem:[%s0 + $0x3c] sm:$0xf]
  %v48 = vld [vmem:[%s1] sm:$0xff]
  %v49 = vld [vmem:[%s1 + $0x8] sm:$0xff]
  %v50 = vld [vmem:[%s1 + $0x10] sm:$0xff]
  %v51 = vld [vmem:[%s1 + $0x18] sm:$0xff]
  %v52 = vld [vmem:[%s1 + $0x20] sm:$0xff]
  %v53 = vld [vmem:[%s1 + $0x28] sm:$0xff]
  %v54 = vld [vmem:[%s1 + $0x30] sm:$0xff]
  %v55 = vld [vmem:[%s1 + $0x38] sm:$0xff]
  %v56 = vld [vmem:[%s1 + $0x40] sm:$0xff]
  %v57 = vld [vmem:[%s1 + $0x48] sm:$0xff]
  %v58 = vld [vmem:[%s1 + $0x50] sm:$0xff]
  %v59 = vld [vmem:[%s1 + $0x58] sm:$0xff]
  %v60 = vld [vmem:[%s1 + $0x60] sm:$0xff]
  %v61 = vld [vmem:[%s1 + $0x68] sm:$0xff]
  %v62 = vld [vmem:[%s1 + $0x70] sm:$0xff]
  %v63 = vld [vmem:[%s1 + $0x78] sm:$0xff]
  %v64 = vld [vmem:[%s2] sm:$0xff]
  %v65 = vld [vmem:[%s2 + $0x8] sm:$0xff]
  %v66 = vld [vmem:[%s2 + $0x10] sm:$0xff]
  %v67 = vld [vmem:[%s2 + $0x18] sm:$0xff]
  %v68 = vld [vmem:[%s3] sm:$0x1]
  %v69 = vpack.c.bf16 %v49, %v48
  %v70 = vpack.c.bf16 %v51, %v50
  %v71 = vpack.c.bf16 %v53, %v52
  %v72 = vpack.c.bf16 %v55, %v54
  %v73 = vpack.c.bf16 %v57, %v56
  %v74 = vpack.c.bf16 %v59, %v58
  %v75 = vpack.c.bf16 %v61, %v60
  %v76 = vpack.c.bf16 %v63, %v62
  %v93 = vunpack.c.l.b16 %v32
  %v94 = vunpack.c.l.b16 %v33
  %v95 = vunpack.c.l.b16 %v34
  %v96 = vunpack.c.l.b16 %v35
  %v97 = vunpack.c.l.b16 %v36
  %v98 = vunpack.c.l.b16 %v37
  %v99 = vunpack.c.l.b16 %v38
  %v100 = vunpack.c.l.b16 %v39
  %v101 = vunpack.c.l.b16 %v40
  %v102 = vunpack.c.l.b16 %v41
  %v103 = vunpack.c.l.b16 %v42
  %v104 = vunpack.c.l.b16 %v43
  %v105 = vunpack.c.l.b16 %v44
  %v106 = vunpack.c.l.b16 %v45
  %v107 = vunpack.c.l.b16 %v46
  %v108 = vunpack.c.l.b16 %v47
  %v109 = vpack.c.b16 %v94, %v93
  %v110 = vpack.c.b16 %v96, %v95
  %v111 = vpack.c.b16 %v98, %v97
  %v112 = vpack.c.b16 %v100, %v99
  %v113 = vpack.c.b16 %v102, %v101
  %v114 = vpack.c.b16 %v104, %v103
  %v115 = vpack.c.b16 %v106, %v105
  %v116 = vpack.c.b16 %v108, %v107
  %125 = vmatprep.subr.bf16.mxu0 0
  %126 = vmatpush1.bf16.msra.mxu0 %v76
  %127 = vmatprep.subr.bf16.mxu0 0
  %128 = vmatpush1.bf16.msra.mxu0 %v75
  %129 = vmatprep.subr.bf16.mxu0 0
  %130 = vmatpush1.bf16.msra.mxu0 %v74
  %131 = vmatprep.subr.bf16.mxu0 0
  %132 = vmatpush1.bf16.msra.mxu0 %v73
  %133 = vmatprep.subr.bf16.mxu0 0
  %134 = vmatpush1.bf16.msra.mxu0 %v72
  %135 = vmatprep.subr.bf16.mxu0 0
  %136 = vmatpush1.bf16.msra.mxu0 %v71
  %137 = vmatprep.subr.bf16.mxu0 0
  %138 = vmatpush1.bf16.msra.mxu0 %v70
  %139 = vmatprep.subr.bf16.mxu0 0
  %140 = vmatpush1.bf16.msra.mxu0 %v69
  %141 = vmatprep.subr.bf16.mxu0 0
  %142 = vmatpush2.bf16.msra.mxu0 0
  %143 = vmatprep.subr.bf16.mxu0 0
  %144 = vmatpush2.bf16.msra.mxu0 0
  %145 = vmatprep.subr.bf16.mxu0 0
  %146 = vmatpush2.bf16.msra.mxu0 0
  %147 = vmatprep.subr.bf16.mxu0 0
  %148 = vmatpush2.bf16.msra.mxu0 0
  %149 = vmatprep.subr.bf16.mxu0 0
  %150 = vmatpush2.bf16.msra.mxu0 0
  %151 = vmatprep.subr.bf16.mxu0 0
  %152 = vmatpush2.bf16.msra.mxu0 0
  %153 = vmatprep.subr.bf16.mxu0 0
  %154 = vmatpush2.bf16.msra.mxu0 0
  %155 = vmatprep.subr.bf16.mxu0 0
  %156 = vmatpush2.bf16.msra.mxu0 0
  %157 = vmatprep.mubr.bf16.mxu0 0
  %158 = vmatmul.mubr.bf16.gmra.mxu0 %v109
  %v159 = vpop.f32.mrf.mxu0
  %v160 = vadd.f32 0.0, %v159
  %v161 = vpop.f32.mrf.mxu0
  %v162 = vpop.f32.mrf.mxu0
  %v163 = vadd.f32 0.0, %v162
  %v164 = vpop.f32.mrf.mxu0
  %165 = vmatprep.mubr.bf16.mxu0 0
  %166 = vmatmul.mubr.bf16.gmra.mxu0 %v110
  %v167 = vpop.f32.mrf.mxu0
  %v168 = vadd.f32 0.0, %v167
  %v169 = vpop.f32.mrf.mxu0
  %v170 = vpop.f32.mrf.mxu0
  %v171 = vadd.f32 0.0, %v170
  %v172 = vpop.f32.mrf.mxu0
  %173 = vmatprep.mubr.bf16.mxu0 0
  %174 = vmatmul.mubr.bf16.gmra.mxu0 %v111
  %v175 = vpop.f32.mrf.mxu0
  %v176 = vadd.f32 0.0, %v175
  %v177 = vpop.f32.mrf.mxu0
  %v178 = vpop.f32.mrf.mxu0
  %v179 = vadd.f32 0.0, %v178
  %v180 = vpop.f32.mrf.mxu0
  %181 = vmatprep.mubr.bf16.mxu0 0
  %182 = vmatmul.mubr.bf16.gmra.mxu0 %v112
  %v183 = vpop.f32.mrf.mxu0
  %v184 = vadd.f32 0.0, %v183
  %v185 = vpop.f32.mrf.mxu0
  %v186 = vpop.f32.mrf.mxu0
  %v187 = vadd.f32 0.0, %v186
  %v188 = vpop.f32.mrf.mxu0
  %189 = vmatprep.mubr.bf16.mxu0 0
  %190 = vmatmul.mubr.bf16.gmra.mxu0 %v113
  %v191 = vpop.f32.mrf.mxu0
  %v192 = vadd.f32 0.0, %v191
  %v193 = vpop.f32.mrf.mxu0
  %v194 = vpop.f32.mrf.mxu0
  %v195 = vadd.f32 0.0, %v194
  %v196 = vpop.f32.mrf.mxu0
  %197 = vmatprep.mubr.bf16.mxu0 0
  %198 = vmatmul.mubr.bf16.gmra.mxu0 %v114
  %v199 = vpop.f32.mrf.mxu0
  %v200 = vadd.f32 0.0, %v199
  %v201 = vpop.f32.mrf.mxu0
  %v202 = vpop.f32.mrf.mxu0
  %v203 = vadd.f32 0.0, %v202
  %v204 = vpop.f32.mrf.mxu0
  %205 = vmatprep.mubr.bf16.mxu0 0
  %206 = vmatmul.mubr.bf16.gmra.mxu0 %v115
  %v207 = vpop.f32.mrf.mxu0
  %v208 = vadd.f32 0.0, %v207
  %v209 = vpop.f32.mrf.mxu0
  %v210 = vpop.f32.mrf.mxu0
  %v211 = vadd.f32 0.0, %v210
  %v212 = vpop.f32.mrf.mxu0
  %213 = vmatprep.mubr.bf16.mxu0 0
  %214 = vmatmul.mubr.bf16.gmra.mxu0 %v116
  %v215 = vpop.f32.mrf.mxu0
  %v216 = vadd.f32 0.0, %v215
  %v217 = vpop.f32.mrf.mxu0
  %v218 = vpop.f32.mrf.mxu0
  %v219 = vadd.f32 0.0, %v218
  %v220 = vpop.f32.mrf.mxu0
  %221 = vdwg.mxu0
  %v223 = vlaneseq
  %v224 = vshrl.u32 %v223, 7
  %v225 = vsub.s32 0, %v224
  %v226 = vrot.slane %v68, %v225
  %vm228 = vcmask 261120
  %v230 = vsel %vm228, %v160, 0
  %v233 = vsel %vm228, %v163, 0
  %v236 = vsel %vm228, %v168, 0
  %v239 = vsel %vm228, %v171, 0
  %v242 = vsel %vm228, %v176, 0
  %v245 = vsel %vm228, %v179, 0
  %v248 = vsel %vm228, %v184, 0
  %v251 = vsel %vm228, %v187, 0
  %v254 = vsel %vm228, %v192, 0
  %v257 = vsel %vm228, %v195, 0
  %v260 = vsel %vm228, %v200, 0
  %v263 = vsel %vm228, %v203, 0
  %v266 = vsel %vm228, %v208, 0
  %v269 = vsel %vm228, %v211, 0
  %v272 = vsel %vm228, %v216, 0
  %v275 = vsel %vm228, %v219, 0
  %277 = vmatprep.subr.mxu0 0.0
  %278 = vmatpush1.msra.mxu0 0.0
  %279 = vmatprep.subr.mxu0 0.0
  %280 = vmatpush1.msra.mxu0 0.0
  %281 = vmatprep.subr.mxu0 0.0
  %282 = vmatpush1.msra.mxu0 0.0
  %283 = vmatprep.subr.mxu0 0.0
  %284 = vmatpush1.msra.mxu0 0.0
  %285 = vmatprep.subr.mxu0 0.0
  %286 = vmatpush1.msra.mxu0 0.0
  %287 = vmatprep.subr.mxu0 0.0
  %288 = vmatpush1.msra.mxu0 0.0
  %289 = vmatprep.subr.mxu0 0.0
  %290 = vmatpush1.msra.mxu0 0.0
  %291 = vmatprep.subr.mxu0 0.0
  %292 = vmatpush1.msra.mxu0 0.0
  %293 = vmatprep.subr.mxu0 0.0
  %294 = vmatpush1.msra.mxu0 0.0
  %295 = vmatprep.subr.mxu0 0.0
  %296 = vmatpush1.msra.mxu0 0.0
  %297 = vmatprep.subr.mxu0 0.0
  %298 = vmatpush1.msra.mxu0 0.0
  %299 = vmatprep.subr.mxu0 0.0
  %300 = vmatpush1.msra.mxu0 0.0
  %301 = vmatprep.subr.mxu0 0.0
  %302 = vmatpush1.msra.mxu0 %v67
  %303 = vmatprep.subr.mxu0 0.0
  %304 = vmatpush1.msra.mxu0 %v66
  %305 = vmatprep.subr.mxu0 0.0
  %306 = vmatpush1.msra.mxu0 %v65
  %307 = vmatprep.subr.mxu0 0.0
  %308 = vmatpush1.msra.mxu0 %v64
  %309 = vmatprep.subr.mxu0 0.0
  %310 = vmatpush2.msra.mxu0 0.0
  %311 = vmatprep.subr.mxu0 0.0
  %312 = vmatpush2.msra.mxu0 0.0
  %313 = vmatprep.subr.mxu0 0.0
  %314 = vmatpush2.msra.mxu0 0.0
  %315 = vmatprep.subr.mxu0 0.0
  %316 = vmatpush2.msra.mxu0 0.0
  %317 = vmatprep.subr.mxu0 0.0
  %318 = vmatpush2.msra.mxu0 0.0
  %319 = vmatprep.subr.mxu0 0.0
  %320 = vmatpush2.msra.mxu0 0.0
  %321 = vmatprep.subr.mxu0 0.0
  %322 = vmatpush2.msra.mxu0 0.0
  %323 = vmatprep.subr.mxu0 0.0
  %324 = vmatpush2.msra.mxu0 0.0
  %325 = vmatprep.subr.mxu0 0.0
  %326 = vmatpush2.msra.mxu0 0.0
  %327 = vmatprep.subr.mxu0 0.0
  %328 = vmatpush2.msra.mxu0 0.0
  %329 = vmatprep.subr.mxu0 0.0
  %330 = vmatpush2.msra.mxu0 0.0
  %331 = vmatprep.subr.mxu0 0.0
  %332 = vmatpush2.msra.mxu0 0.0
  %333 = vmatprep.subr.mxu0 0.0
  %334 = vmatpush2.msra.mxu0 0.0
  %335 = vmatprep.subr.mxu0 0.0
  %336 = vmatpush2.msra.mxu0 0.0
  %337 = vmatprep.subr.mxu0 0.0
  %338 = vmatpush2.msra.mxu0 0.0
  %339 = vmatprep.subr.mxu0 0.0
  %340 = vmatpush2.msra.mxu0 0.0
  %341 = vmatprep.mubr.f32.mxu0 0.0
  %342 = vmatmul.mubr.f32.gmra.mxu0 %v230
  %v343 = vpop.f32.mrf.mxu0
  %v344 = vadd.f32 %v226, %v343
  %v345 = vpop.f32.mrf.mxu0
  %346 = vmatprep.mubr.f32.mxu0 0.0
  %347 = vmatmul.mubr.f32.gmra.mxu0 %v233
  %v348 = vpop.f32.mrf.mxu0
  %v349 = vadd.f32 %v226, %v348
  %v350 = vpop.f32.mrf.mxu0
  %351 = vmatprep.mubr.f32.mxu0 0.0
  %352 = vmatmul.mubr.f32.gmra.mxu0 %v236
  %v353 = vpop.f32.mrf.mxu0
  %v354 = vadd.f32 %v226, %v353
  %v355 = vpop.f32.mrf.mxu0
  %356 = vmatprep.mubr.f32.mxu0 0.0
  %357 = vmatmul.mubr.f32.gmra.mxu0 %v239
  %v358 = vpop.f32.mrf.mxu0
  %v359 = vadd.f32 %v226, %v358
  %v360 = vpop.f32.mrf.mxu0
  %361 = vmatprep.mubr.f32.mxu0 0.0
  %362 = vmatmul.mubr.f32.gmra.mxu0 %v242
  %v363 = vpop.f32.mrf.mxu0
  %v364 = vadd.f32 %v226, %v363
  %v365 = vpop.f32.mrf.mxu0
  %366 = vmatprep.mubr.f32.mxu0 0.0
  %367 = vmatmul.mubr.f32.gmra.mxu0 %v245
  %v368 = vpop.f32.mrf.mxu0
  %v369 = vadd.f32 %v226, %v368
  %v370 = vpop.f32.mrf.mxu0
  %371 = vmatprep.mubr.f32.mxu0 0.0
  %372 = vmatmul.mubr.f32.gmra.mxu0 %v248
  %v373 = vpop.f32.mrf.mxu0
  %v374 = vadd.f32 %v226, %v373
  %v375 = vpop.f32.mrf.mxu0
  %376 = vmatprep.mubr.f32.mxu0 0.0
  %377 = vmatmul.mubr.f32.gmra.mxu0 %v251
  %v378 = vpop.f32.mrf.mxu0
  %v379 = vadd.f32 %v226, %v378
  %v380 = vpop.f32.mrf.mxu0
  %381 = vmatprep.mubr.f32.mxu0 0.0
  %382 = vmatmul.mubr.f32.gmra.mxu0 %v254
  %v383 = vpop.f32.mrf.mxu0
  %v384 = vadd.f32 %v226, %v383
  %v385 = vpop.f32.mrf.mxu0
  %386 = vmatprep.mubr.f32.mxu0 0.0
  %387 = vmatmul.mubr.f32.gmra.mxu0 %v257
  %v388 = vpop.f32.mrf.mxu0
  %v389 = vadd.f32 %v226, %v388
  %v390 = vpop.f32.mrf.mxu0
  %391 = vmatprep.mubr.f32.mxu0 0.0
  %392 = vmatmul.mubr.f32.gmra.mxu0 %v260
  %v393 = vpop.f32.mrf.mxu0
  %v394 = vadd.f32 %v226, %v393
  %v395 = vpop.f32.mrf.mxu0
  %396 = vmatprep.mubr.f32.mxu0 0.0
  %397 = vmatmul.mubr.f32.gmra.mxu0 %v263
  %v398 = vpop.f32.mrf.mxu0
  %v399 = vadd.f32 %v226, %v398
  %v400 = vpop.f32.mrf.mxu0
  %401 = vmatprep.mubr.f32.mxu0 0.0
  %402 = vmatmul.mubr.f32.gmra.mxu0 %v266
  %v403 = vpop.f32.mrf.mxu0
  %v404 = vadd.f32 %v226, %v403
  %v405 = vpop.f32.mrf.mxu0
  %406 = vmatprep.mubr.f32.mxu0 0.0
  %407 = vmatmul.mubr.f32.gmra.mxu0 %v269
  %v408 = vpop.f32.mrf.mxu0
  %v409 = vadd.f32 %v226, %v408
  %v410 = vpop.f32.mrf.mxu0
  %411 = vmatprep.mubr.f32.mxu0 0.0
  %412 = vmatmul.mubr.f32.gmra.mxu0 %v272
  %v413 = vpop.f32.mrf.mxu0
  %v414 = vadd.f32 %v226, %v413
  %v415 = vpop.f32.mrf.mxu0
  %416 = vmatprep.mubr.f32.mxu0 0.0
  %417 = vmatmul.mubr.f32.gmra.mxu0 %v275
  %v418 = vpop.f32.mrf.mxu0
  %v419 = vadd.f32 %v226, %v418
  %v420 = vpop.f32.mrf.mxu0
  %421 = vdwg.mxu0
  %v422 = vmax.f32 %v344, 0.0
  %v423 = vmax.f32 %v349, 0.0
  %v424 = vmax.f32 %v354, 0.0
  %v425 = vmax.f32 %v359, 0.0
  %v426 = vmax.f32 %v364, 0.0
  %v427 = vmax.f32 %v369, 0.0
  %v428 = vmax.f32 %v374, 0.0
  %v429 = vmax.f32 %v379, 0.0
  %v430 = vmax.f32 %v384, 0.0
  %v431 = vmax.f32 %v389, 0.0
  %v432 = vmax.f32 %v394, 0.0
  %v433 = vmax.f32 %v399, 0.0
  %v434 = vmax.f32 %v404, 0.0
  %v435 = vmax.f32 %v409, 0.0
  %v436 = vmax.f32 %v414, 0.0
  %v437 = vmax.f32 %v419, 0.0
  %v438 = vld [vmem:[%s4] sm:$0xff]
  %v439 = vld [vmem:[%s4 + $0x8] sm:$0xff]
  %v440 = vld [vmem:[%s4 + $0x10] sm:$0xff]
  %v441 = vld [vmem:[%s4 + $0x18] sm:$0xff]
  %v442 = vld [vmem:[%s4 + $0x20] sm:$0xff]
  %v443 = vld [vmem:[%s4 + $0x28] sm:$0xff]
  %v444 = vld [vmem:[%s4 + $0x30] sm:$0xff]
  %v445 = vld [vmem:[%s4 + $0x38] sm:$0xff]
  %v446 = vld [vmem:[%s4 + $0x40] sm:$0xff]
  %v447 = vld [vmem:[%s4 + $0x48] sm:$0xff]
  %v448 = vld [vmem:[%s4 + $0x50] sm:$0xff]
  %v449 = vld [vmem:[%s4 + $0x58] sm:$0xff]
  %v450 = vld [vmem:[%s4 + $0x60] sm:$0xff]
  %v451 = vld [vmem:[%s4 + $0x68] sm:$0xff]
  %v452 = vld [vmem:[%s4 + $0x70] sm:$0xff]
  %v453 = vld [vmem:[%s4 + $0x78] sm:$0xff]
  %v454 = vld [vmem:[%s5] sm:$0x1]
  %455 = vmatprep.subr.mxu0 0.0
  %456 = vmatpush1.msra.mxu0 %v453
  %457 = vmatprep.subr.mxu0 0.0
  %458 = vmatpush1.msra.mxu0 %v452
  %459 = vmatprep.subr.mxu0 0.0
  %460 = vmatpush1.msra.mxu0 %v451
  %461 = vmatprep.subr.mxu0 0.0
  %462 = vmatpush1.msra.mxu0 %v450
  %463 = vmatprep.subr.mxu0 0.0
  %464 = vmatpush1.msra.mxu0 %v449
  %465 = vmatprep.subr.mxu0 0.0
  %466 = vmatpush1.msra.mxu0 %v448
  %467 = vmatprep.subr.mxu0 0.0
  %468 = vmatpush1.msra.mxu0 %v447
  %469 = vmatprep.subr.mxu0 0.0
  %470 = vmatpush1.msra.mxu0 %v446
  %471 = vmatprep.subr.mxu0 0.0
  %472 = vmatpush1.msra.mxu0 %v445
  %473 = vmatprep.subr.mxu0 0.0
  %474 = vmatpush1.msra.mxu0 %v444
  %475 = vmatprep.subr.mxu0 0.0
  %476 = vmatpush1.msra.mxu0 %v443
  %477 = vmatprep.subr.mxu0 0.0
  %478 = vmatpush1.msra.mxu0 %v442
  %479 = vmatprep.subr.mxu0 0.0
  %480 = vmatpush1.msra.mxu0 %v441
  %481 = vmatprep.subr.mxu0 0.0
  %482 = vmatpush1.msra.mxu0 %v440
  %483 = vmatprep.subr.mxu0 0.0
  %484 = vmatpush1.msra.mxu0 %v439
  %485 = vmatprep.subr.mxu0 0.0
  %486 = vmatpush1.msra.mxu0 %v438
  %487 = vmatprep.subr.mxu0 0.0
  %488 = vmatpush2.msra.mxu0 0.0
  %489 = vmatprep.subr.mxu0 0.0
  %490 = vmatpush2.msra.mxu0 0.0
  %491 = vmatprep.subr.mxu0 0.0
  %492 = vmatpush2.msra.mxu0 0.0
  %493 = vmatprep.subr.mxu0 0.0
  %494 = vmatpush2.msra.mxu0 0.0
  %495 = vmatprep.subr.mxu0 0.0
  %496 = vmatpush2.msra.mxu0 0.0
  %497 = vmatprep.subr.mxu0 0.0
  %498 = vmatpush2.msra.mxu0 0.0
  %499 = vmatprep.subr.mxu0 0.0
  %500 = vmatpush2.msra.mxu0 0.0
  %501 = vmatprep.subr.mxu0 0.0
  %502 = vmatpush2.msra.mxu0 0.0
  %503 = vmatprep.subr.mxu0 0.0
  %504 = vmatpush2.msra.mxu0 0.0
  %505 = vmatprep.subr.mxu0 0.0
  %506 = vmatpush2.msra.mxu0 0.0
  %507 = vmatprep.subr.mxu0 0.0
  %508 = vmatpush2.msra.mxu0 0.0
  %509 = vmatprep.subr.mxu0 0.0
  %510 = vmatpush2.msra.mxu0 0.0
  %511 = vmatprep.subr.mxu0 0.0
  %512 = vmatpush2.msra.mxu0 0.0
  %513 = vmatprep.subr.mxu0 0.0
  %514 = vmatpush2.msra.mxu0 0.0
  %515 = vmatprep.subr.mxu0 0.0
  %516 = vmatpush2.msra.mxu0 0.0
  %517 = vmatprep.subr.mxu0 0.0
  %518 = vmatpush2.msra.mxu0 0.0
  %519 = vmatprep.mubr.f32.mxu0 0.0
  %520 = vmatmul.mubr.f32.gmra.mxu0 %v422
  %v521 = vpop.f32.mrf.mxu0
  %v522 = vadd.f32 0.0, %v521
  %v523 = vpop.f32.mrf.mxu0
  %524 = vmatprep.mubr.f32.mxu0 0.0
  %525 = vmatmul.mubr.f32.gmra.mxu0 %v423
  %v526 = vpop.f32.mrf.mxu0
  %v527 = vadd.f32 0.0, %v526
  %v528 = vpop.f32.mrf.mxu0
  %529 = vmatprep.mubr.f32.mxu0 0.0
  %530 = vmatmul.mubr.f32.gmra.mxu0 %v424
  %v531 = vpop.f32.mrf.mxu0
  %v532 = vadd.f32 0.0, %v531
  %v533 = vpop.f32.mrf.mxu0
  %534 = vmatprep.mubr.f32.mxu0 0.0
  %535 = vmatmul.mubr.f32.gmra.mxu0 %v425
  %v536 = vpop.f32.mrf.mxu0
  %v537 = vadd.f32 0.0, %v536
  %v538 = vpop.f32.mrf.mxu0
  %539 = vmatprep.mubr.f32.mxu0 0.0
  %540 = vmatmul.mubr.f32.gmra.mxu0 %v426
  %v541 = vpop.f32.mrf.mxu0
  %v542 = vadd.f32 0.0, %v541
  %v543 = vpop.f32.mrf.mxu0
  %544 = vmatprep.mubr.f32.mxu0 0.0
  %545 = vmatmul.mubr.f32.gmra.mxu0 %v427
  %v546 = vpop.f32.mrf.mxu0
  %v547 = vadd.f32 0.0, %v546
  %v548 = vpop.f32.mrf.mxu0
  %549 = vmatprep.mubr.f32.mxu0 0.0
  %550 = vmatmul.mubr.f32.gmra.mxu0 %v428
  %v551 = vpop.f32.mrf.mxu0
  %v552 = vadd.f32 0.0, %v551
  %v553 = vpop.f32.mrf.mxu0
  %554 = vmatprep.mubr.f32.mxu0 0.0
  %555 = vmatmul.mubr.f32.gmra.mxu0 %v429
  %v556 = vpop.f32.mrf.mxu0
  %v557 = vadd.f32 0.0, %v556
  %v558 = vpop.f32.mrf.mxu0
  %559 = vmatprep.mubr.f32.mxu0 0.0
  %560 = vmatmul.mubr.f32.gmra.mxu0 %v430
  %v561 = vpop.f32.mrf.mxu0
  %v562 = vadd.f32 0.0, %v561
  %v563 = vpop.f32.mrf.mxu0
  %564 = vmatprep.mubr.f32.mxu0 0.0
  %565 = vmatmul.mubr.f32.gmra.mxu0 %v431
  %v566 = vpop.f32.mrf.mxu0
  %v567 = vadd.f32 0.0, %v566
  %v568 = vpop.f32.mrf.mxu0
  %569 = vmatprep.mubr.f32.mxu0 0.0
  %570 = vmatmul.mubr.f32.gmra.mxu0 %v432
  %v571 = vpop.f32.mrf.mxu0
  %v572 = vadd.f32 0.0, %v571
  %v573 = vpop.f32.mrf.mxu0
  %574 = vmatprep.mubr.f32.mxu0 0.0
  %575 = vmatmul.mubr.f32.gmra.mxu0 %v433
  %v576 = vpop.f32.mrf.mxu0
  %v577 = vadd.f32 0.0, %v576
  %v578 = vpop.f32.mrf.mxu0
  %579 = vmatprep.mubr.f32.mxu0 0.0
  %580 = vmatmul.mubr.f32.gmra.mxu0 %v434
  %v581 = vpop.f32.mrf.mxu0
  %v582 = vadd.f32 0.0, %v581
  %v583 = vpop.f32.mrf.mxu0
  %584 = vmatprep.mubr.f32.mxu0 0.0
  %585 = vmatmul.mubr.f32.gmra.mxu0 %v435
  %v586 = vpop.f32.mrf.mxu0
  %v587 = vadd.f32 0.0, %v586
  %v588 = vpop.f32.mrf.mxu0
  %589 = vmatprep.mubr.f32.mxu0 0.0
  %590 = vmatmul.mubr.f32.gmra.mxu0 %v436
  %v591 = vpop.f32.mrf.mxu0
  %v592 = vadd.f32 0.0, %v591
  %v593 = vpop.f32.mrf.mxu0
  %594 = vmatprep.mubr.f32.mxu0 0.0
  %595 = vmatmul.mubr.f32.gmra.mxu0 %v437
  %v596 = vpop.f32.mrf.mxu0
  %v597 = vadd.f32 0.0, %v596
  %v598 = vpop.f32.mrf.mxu0
  %599 = vdwg.mxu0
  %v600 = vpack.c.bf16 %v527, %v522
  %v601 = vpack.c.bf16 %v537, %v532
  %v602 = vpack.c.bf16 %v547, %v542
  %v603 = vpack.c.bf16 %v557, %v552
  %v604 = vpack.c.bf16 %v567, %v562
  %v605 = vpack.c.bf16 %v577, %v572
  %v606 = vpack.c.bf16 %v587, %v582
  %v607 = vpack.c.bf16 %v597, %v592
  %v609 = vlaneseq
  %v610 = vshrl.u32 %v609, 7
  %v611 = vsub.s32 0, %v610
  %v612 = vrot.slane %v454, %v611
  %614 = vmatprep.subr.bf16.mxu0 0
  %615 = vmatpush1.bf16.msra.mxu0 %v607
  %616 = vmatprep.subr.bf16.mxu0 0
  %617 = vmatpush1.bf16.msra.mxu0 %v606
  %618 = vmatprep.subr.bf16.mxu0 0
  %619 = vmatpush1.bf16.msra.mxu0 %v605
  %620 = vmatprep.subr.bf16.mxu0 0
  %621 = vmatpush1.bf16.msra.mxu0 %v604
  %622 = vmatprep.subr.bf16.mxu0 0
  %623 = vmatpush1.bf16.msra.mxu0 %v603
  %624 = vmatprep.subr.bf16.mxu0 0
  %625 = vmatpush1.bf16.msra.mxu0 %v602
  %626 = vmatprep.subr.bf16.mxu0 0
  %627 = vmatpush1.bf16.msra.mxu0 %v601
  %628 = vmatprep.subr.bf16.mxu0 0
  %629 = vmatpush1.bf16.msra.mxu0 %v600
  %630 = vmatprep.subr.bf16.mxu0 0
  %631 = vmatpush2.bf16.msra.mxu0 0
  %632 = vmatprep.subr.bf16.mxu0 0
  %633 = vmatpush2.bf16.msra.mxu0 0
  %634 = vmatprep.subr.bf16.mxu0 0
  %635 = vmatpush2.bf16.msra.mxu0 0
  %636 = vmatprep.subr.bf16.mxu0 0
  %637 = vmatpush2.bf16.msra.mxu0 0
  %638 = vmatprep.subr.bf16.mxu0 0
  %639 = vmatpush2.bf16.msra.mxu0 0
  %640 = vmatprep.subr.bf16.mxu0 0
  %641 = vmatpush2.bf16.msra.mxu0 0
  %642 = vmatprep.subr.bf16.mxu0 0
  %643 = vmatpush2.bf16.msra.mxu0 0
  %644 = vmatprep.subr.bf16.mxu0 0
  %645 = vmatpush2.bf16.msra.mxu0 0
  %646 = vmatprep.mubr.bf16.mxu0 0
  %647 = vmatmul.mubr.bf16.gmra.mxu0 %v109
  %v648 = vpop.f32.mrf.mxu0
  %v649 = vadd.f32 %v612, %v648
  %v650 = vpop.f32.mrf.mxu0
  %v651 = vpop.f32.mrf.mxu0
  %v652 = vadd.f32 %v612, %v651
  %v653 = vpop.f32.mrf.mxu0
  %654 = vmatprep.mubr.bf16.mxu0 0
  %655 = vmatmul.mubr.bf16.gmra.mxu0 %v110
  %v656 = vpop.f32.mrf.mxu0
  %v657 = vadd.f32 %v612, %v656
  %v658 = vpop.f32.mrf.mxu0
  %v659 = vpop.f32.mrf.mxu0
  %v660 = vadd.f32 %v612, %v659
  %v661 = vpop.f32.mrf.mxu0
  %662 = vmatprep.mubr.bf16.mxu0 0
  %663 = vmatmul.mubr.bf16.gmra.mxu0 %v111
  %v664 = vpop.f32.mrf.mxu0
  %v665 = vadd.f32 %v612, %v664
  %v666 = vpop.f32.mrf.mxu0
  %v667 = vpop.f32.mrf.mxu0
  %v668 = vadd.f32 %v612, %v667
  %v669 = vpop.f32.mrf.mxu0
  %670 = vmatprep.mubr.bf16.mxu0 0
  %671 = vmatmul.mubr.bf16.gmra.mxu0 %v112
  %v672 = vpop.f32.mrf.mxu0
  %v673 = vadd.f32 %v612, %v672
  %v674 = vpop.f32.mrf.mxu0
  %v675 = vpop.f32.mrf.mxu0
  %v676 = vadd.f32 %v612, %v675
  %v677 = vpop.f32.mrf.mxu0
  %678 = vmatprep.mubr.bf16.mxu0 0
  %679 = vmatmul.mubr.bf16.gmra.mxu0 %v113
  %v680 = vpop.f32.mrf.mxu0
  %v681 = vadd.f32 %v612, %v680
  %v682 = vpop.f32.mrf.mxu0
  %v683 = vpop.f32.mrf.mxu0
  %v684 = vadd.f32 %v612, %v683
  %v685 = vpop.f32.mrf.mxu0
  %686 = vmatprep.mubr.bf16.mxu0 0
  %687 = vmatmul.mubr.bf16.gmra.mxu0 %v114
  %v688 = vpop.f32.mrf.mxu0
  %v689 = vadd.f32 %v612, %v688
  %v690 = vpop.f32.mrf.mxu0
  %v691 = vpop.f32.mrf.mxu0
  %v692 = vadd.f32 %v612, %v691
  %v693 = vpop.f32.mrf.mxu0
  %694 = vmatprep.mubr.bf16.mxu0 0
  %695 = vmatmul.mubr.bf16.gmra.mxu0 %v115
  %v696 = vpop.f32.mrf.mxu0
  %v697 = vadd.f32 %v612, %v696
  %v698 = vpop.f32.mrf.mxu0
  %v699 = vpop.f32.mrf.mxu0
  %v700 = vadd.f32 %v612, %v699
  %v701 = vpop.f32.mrf.mxu0
  %702 = vmatprep.mubr.bf16.mxu0 0
  %703 = vmatmul.mubr.bf16.gmra.mxu0 %v116
  %v704 = vpop.f32.mrf.mxu0
  %v705 = vadd.f32 %v612, %v704
  %v706 = vpop.f32.mrf.mxu0
  %v707 = vpop.f32.mrf.mxu0
  %v708 = vadd.f32 %v612, %v707
  %v709 = vpop.f32.mrf.mxu0
  %710 = vdwg.mxu0
  %v711 = vmax.f32 %v649, 0.0
  %v712 = vmax.f32 %v652, 0.0
  %v713 = vmax.f32 %v657, 0.0
  %v714 = vmax.f32 %v660, 0.0
  %v715 = vmax.f32 %v665, 0.0
  %v716 = vmax.f32 %v668, 0.0
  %v717 = vmax.f32 %v673, 0.0
  %v718 = vmax.f32 %v676, 0.0
  %v719 = vmax.f32 %v681, 0.0
  %v720 = vmax.f32 %v684, 0.0
  %v721 = vmax.f32 %v689, 0.0
  %v722 = vmax.f32 %v692, 0.0
  %v723 = vmax.f32 %v697, 0.0
  %v724 = vmax.f32 %v700, 0.0
  %v725 = vmax.f32 %v705, 0.0
  %v726 = vmax.f32 %v708, 0.0
  %727 = vst [vmem:[%s8] sm:$0xff] %v711
  %728 = vst [vmem:[%s8 + $0x8] sm:$0xff] %v712
  %729 = vst [vmem:[%s8 + $0x10] sm:$0xff] %v713
  %730 = vst [vmem:[%s8 + $0x18] sm:$0xff] %v714
  %731 = vst [vmem:[%s8 + $0x20] sm:$0xff] %v715
  %732 = vst [vmem:[%s8 + $0x28] sm:$0xff] %v716
  %733 = vst [vmem:[%s8 + $0x30] sm:$0xff] %v717
  %734 = vst [vmem:[%s8 + $0x38] sm:$0xff] %v718
  %735 = vst [vmem:[%s8 + $0x40] sm:$0xff] %v719
  %736 = vst [vmem:[%s8 + $0x48] sm:$0xff] %v720
  %737 = vst [vmem:[%s8 + $0x50] sm:$0xff] %v721
  %738 = vst [vmem:[%s8 + $0x58] sm:$0xff] %v722
  %739 = vst [vmem:[%s8 + $0x60] sm:$0xff] %v723
  %740 = vst [vmem:[%s8 + $0x68] sm:$0xff] %v724
  %741 = vst [vmem:[%s8 + $0x70] sm:$0xff] %v725
  %742 = vst [vmem:[%s8 + $0x78] sm:$0xff] %v726
  %v743 = vld [vmem:[%s6] sm:$0xff]
  %v744 = vld [vmem:[%s6 + $0x8] sm:$0xff]
  %v745 = vld [vmem:[%s6 + $0x10] sm:$0xff]
  %v746 = vld [vmem:[%s6 + $0x18] sm:$0xff]
  %v747 = vld [vmem:[%s6 + $0x20] sm:$0xff]
  %v748 = vld [vmem:[%s6 + $0x28] sm:$0xff]
  %v749 = vld [vmem:[%s6 + $0x30] sm:$0xff]
  %v750 = vld [vmem:[%s6 + $0x38] sm:$0xff]
  %v751 = vld [vmem:[%s6 + $0x40] sm:$0xff]
  %v752 = vld [vmem:[%s6 + $0x48] sm:$0xff]
  %v753 = vld [vmem:[%s6 + $0x50] sm:$0xff]
  %v754 = vld [vmem:[%s6 + $0x58] sm:$0xff]
  %v755 = vld [vmem:[%s6 + $0x60] sm:$0xff]
  %v756 = vld [vmem:[%s6 + $0x68] sm:$0xff]
  %v757 = vld [vmem:[%s6 + $0x70] sm:$0xff]
  %v758 = vld [vmem:[%s6 + $0x78] sm:$0xff]
  %v759 = vld [vmem:[%s7] sm:$0x1]
  %v761 = vlaneseq
  %v762 = vshrl.u32 %v761, 7
  %v763 = vsub.s32 0, %v762
  %v764 = vrot.slane %v759, %v763
  %766 = vmatprep.subr.mxu0 0.0
  %767 = vmatpush1.msra.mxu0 %v758
  %768 = vmatprep.subr.mxu0 0.0
  %769 = vmatpush1.msra.mxu0 %v757
  %770 = vmatprep.subr.mxu0 0.0
  %771 = vmatpush1.msra.mxu0 %v756
  %772 = vmatprep.subr.mxu0 0.0
  %773 = vmatpush1.msra.mxu0 %v755
  %774 = vmatprep.subr.mxu0 0.0
  %775 = vmatpush1.msra.mxu0 %v754
  %776 = vmatprep.subr.mxu0 0.0
  %777 = vmatpush1.msra.mxu0 %v753
  %778 = vmatprep.subr.mxu0 0.0
  %779 = vmatpush1.msra.mxu0 %v752
  %780 = vmatprep.subr.mxu0 0.0
  %781 = vmatpush1.msra.mxu0 %v751
  %782 = vmatprep.subr.mxu0 0.0
  %783 = vmatpush1.msra.mxu0 %v750
  %784 = vmatprep.subr.mxu0 0.0
  %785 = vmatpush1.msra.mxu0 %v749
  %786 = vmatprep.subr.mxu0 0.0
  %787 = vmatpush1.msra.mxu0 %v748
  %788 = vmatprep.subr.mxu0 0.0
  %789 = vmatpush1.msra.mxu0 %v747
  %790 = vmatprep.subr.mxu0 0.0
  %791 = vmatpush1.msra.mxu0 %v746
  %792 = vmatprep.subr.mxu0 0.0
  %793 = vmatpush1.msra.mxu0 %v745
  %794 = vmatprep.subr.mxu0 0.0
  %795 = vmatpush1.msra.mxu0 %v744
  %796 = vmatprep.subr.mxu0 0.0
  %797 = vmatpush1.msra.mxu0 %v743
  %798 = vmatprep.subr.mxu0 0.0
  %799 = vmatpush2.msra.mxu0 0.0
  %800 = vmatprep.subr.mxu0 0.0
  %801 = vmatpush2.msra.mxu0 0.0
  %802 = vmatprep.subr.mxu0 0.0
  %803 = vmatpush2.msra.mxu0 0.0
  %804 = vmatprep.subr.mxu0 0.0
  %805 = vmatpush2.msra.mxu0 0.0
  %806 = vmatprep.subr.mxu0 0.0
  %807 = vmatpush2.msra.mxu0 0.0
  %808 = vmatprep.subr.mxu0 0.0
  %809 = vmatpush2.msra.mxu0 0.0
  %810 = vmatprep.subr.mxu0 0.0
  %811 = vmatpush2.msra.mxu0 0.0
  %812 = vmatprep.subr.mxu0 0.0
  %813 = vmatpush2.msra.mxu0 0.0
  %814 = vmatprep.subr.mxu0 0.0
  %815 = vmatpush2.msra.mxu0 0.0
  %816 = vmatprep.subr.mxu0 0.0
  %817 = vmatpush2.msra.mxu0 0.0
  %818 = vmatprep.subr.mxu0 0.0
  %819 = vmatpush2.msra.mxu0 0.0
  %820 = vmatprep.subr.mxu0 0.0
  %821 = vmatpush2.msra.mxu0 0.0
  %822 = vmatprep.subr.mxu0 0.0
  %823 = vmatpush2.msra.mxu0 0.0
  %824 = vmatprep.subr.mxu0 0.0
  %825 = vmatpush2.msra.mxu0 0.0
  %826 = vmatprep.subr.mxu0 0.0
  %827 = vmatpush2.msra.mxu0 0.0
  %828 = vmatprep.subr.mxu0 0.0
  %829 = vmatpush2.msra.mxu0 0.0
  %830 = vmatprep.mubr.f32.mxu0 0.0
  %831 = vmatmul.mubr.f32.gmra.mxu0 %v711
  %v832 = vpop.f32.mrf.mxu0
  %v833 = vadd.f32 %v764, %v832
  %v834 = vpop.f32.mrf.mxu0
  %835 = vmatprep.mubr.f32.mxu0 0.0
  %836 = vmatmul.mubr.f32.gmra.mxu0 %v712
  %v837 = vpop.f32.mrf.mxu0
  %v838 = vadd.f32 %v764, %v837
  %v839 = vpop.f32.mrf.mxu0
  %840 = vmatprep.mubr.f32.mxu0 0.0
  %841 = vmatmul.mubr.f32.gmra.mxu0 %v713
  %v842 = vpop.f32.mrf.mxu0
  %v843 = vadd.f32 %v764, %v842
  %v844 = vpop.f32.mrf.mxu0
  %845 = vmatprep.mubr.f32.mxu0 0.0
  %846 = vmatmul.mubr.f32.gmra.mxu0 %v714
  %v847 = vpop.f32.mrf.mxu0
  %v848 = vadd.f32 %v764, %v847
  %v849 = vpop.f32.mrf.mxu0
  %850 = vmatprep.mubr.f32.mxu0 0.0
  %851 = vmatmul.mubr.f32.gmra.mxu0 %v715
  %v852 = vpop.f32.mrf.mxu0
  %v853 = vadd.f32 %v764, %v852
  %v854 = vpop.f32.mrf.mxu0
  %855 = vmatprep.mubr.f32.mxu0 0.0
  %856 = vmatmul.mubr.f32.gmra.mxu0 %v716
  %v857 = vpop.f32.mrf.mxu0
  %v858 = vadd.f32 %v764, %v857
  %v859 = vpop.f32.mrf.mxu0
  %860 = vmatprep.mubr.f32.mxu0 0.0
  %861 = vmatmul.mubr.f32.gmra.mxu0 %v717
  %v862 = vpop.f32.mrf.mxu0
  %v863 = vadd.f32 %v764, %v862
  %v864 = vpop.f32.mrf.mxu0
  %865 = vmatprep.mubr.f32.mxu0 0.0
  %866 = vmatmul.mubr.f32.gmra.mxu0 %v718
  %v867 = vpop.f32.mrf.mxu0
  %v868 = vadd.f32 %v764, %v867
  %v869 = vpop.f32.mrf.mxu0
  %870 = vmatprep.mubr.f32.mxu0 0.0
  %871 = vmatmul.mubr.f32.gmra.mxu0 %v719
  %v872 = vpop.f32.mrf.mxu0
  %v873 = vadd.f32 %v764, %v872
  %v874 = vpop.f32.mrf.mxu0
  %875 = vmatprep.mubr.f32.mxu0 0.0
  %876 = vmatmul.mubr.f32.gmra.mxu0 %v720
  %v877 = vpop.f32.mrf.mxu0
  %v878 = vadd.f32 %v764, %v877
  %v879 = vpop.f32.mrf.mxu0
  %880 = vmatprep.mubr.f32.mxu0 0.0
  %881 = vmatmul.mubr.f32.gmra.mxu0 %v721
  %v882 = vpop.f32.mrf.mxu0
  %v883 = vadd.f32 %v764, %v882
  %v884 = vpop.f32.mrf.mxu0
  %885 = vmatprep.mubr.f32.mxu0 0.0
  %886 = vmatmul.mubr.f32.gmra.mxu0 %v722
  %v887 = vpop.f32.mrf.mxu0
  %v888 = vadd.f32 %v764, %v887
  %v889 = vpop.f32.mrf.mxu0
  %890 = vmatprep.mubr.f32.mxu0 0.0
  %891 = vmatmul.mubr.f32.gmra.mxu0 %v723
  %v892 = vpop.f32.mrf.mxu0
  %v893 = vadd.f32 %v764, %v892
  %v894 = vpop.f32.mrf.mxu0
  %895 = vmatprep.mubr.f32.mxu0 0.0
  %896 = vmatmul.mubr.f32.gmra.mxu0 %v724
  %v897 = vpop.f32.mrf.mxu0
  %v898 = vadd.f32 %v764, %v897
  %v899 = vpop.f32.mrf.mxu0
  %900 = vmatprep.mubr.f32.mxu0 0.0
  %901 = vmatmul.mubr.f32.gmra.mxu0 %v725
  %v902 = vpop.f32.mrf.mxu0
  %v903 = vadd.f32 %v764, %v902
  %v904 = vpop.f32.mrf.mxu0
  %905 = vmatprep.mubr.f32.mxu0 0.0
  %906 = vmatmul.mubr.f32.gmra.mxu0 %v726
  %v907 = vpop.f32.mrf.mxu0
  %v908 = vadd.f32 %v764, %v907
  %v909 = vpop.f32.mrf.mxu0
  %910 = vdwg.mxu0
  %911 = vst [vmem:[%s9] sm:$0xff] %v833
  %912 = vst [vmem:[%s9 + $0x8] sm:$0xff] %v838
  %913 = vst [vmem:[%s9 + $0x10] sm:$0xff] %v843
  %914 = vst [vmem:[%s9 + $0x18] sm:$0xff] %v848
  %915 = vst [vmem:[%s9 + $0x20] sm:$0xff] %v853
  %916 = vst [vmem:[%s9 + $0x28] sm:$0xff] %v858
  %917 = vst [vmem:[%s9 + $0x30] sm:$0xff] %v863
  %918 = vst [vmem:[%s9 + $0x38] sm:$0xff] %v868
  %919 = vst [vmem:[%s9 + $0x40] sm:$0xff] %v873
  %920 = vst [vmem:[%s9 + $0x48] sm:$0xff] %v878
  %921 = vst [vmem:[%s9 + $0x50] sm:$0xff] %v883
  %922 = vst [vmem:[%s9 + $0x58] sm:$0xff] %v888
  %923 = vst [vmem:[%s9 + $0x60] sm:$0xff] %v893
  %924 = vst [vmem:[%s9 + $0x68] sm:$0xff] %v898
  %925 = vst [vmem:[%s9 + $0x70] sm:$0xff] %v903
  %926 = vst [vmem:[%s9 + $0x78] sm:$0xff] %v908
  // Predicated region
  $region34: #{gcn_forward.1} parent=0 // pred_check
    _
  $region35: #{gcn_forward.1} parent=0 // pred_check_branch
    %928 = sbr.rel (0) target = $region37
  $region36: #{gcn_forward.1} parent=0 // pred_region
    _
  $region37: #{gcn_forward.1} parent=0 // pred_fallthru
    _
  // Predicated region
  $region38: #{gcn_forward.1} parent=0 // pred_check
    _
  $region39: #{gcn_forward.1} parent=0 // pred_check_branch
    %930 = sbr.rel (0) target = $region41
  $region40: #{gcn_forward.1} parent=0 // pred_region
    _
  $region41: #{gcn_forward.1} parent=0 // pred_fallthru
    _
  // Predicated region
  $region42: #{gcn_forward.1} parent=0 // pred_check
    _
  $region43: #{gcn_forward.1} parent=0 // pred_check_branch
    %932 = sbr.rel (0) target = $region45
  $region44: #{gcn_forward.1} parent=0 // pred_region
    _
  $region45: #{gcn_forward.1} parent=0 // pred_fallthru
    _
  // Predicated region
  $region46: #{gcn_forward.1} parent=0 // pred_check
    _
  $region47: #{gcn_forward.1} parent=0 // pred_check_branch
    %934 = sbr.rel (0) target = $region49
  $region48: #{gcn_forward.1} parent=0 // pred_region
    _
  $region49: #{gcn_forward.1} parent=0 // pred_fallthru
    _

</llo_original>
